<compile_context>
chip_gen: v7x
topology: tpu7x:2x2x1
jax: 0.10.0
libtpu: 0.0.40
codegen_flags: <defaults>
</compile_context>

<pallas_src>
import math

import jax
import jax.numpy as jnp
from jax.experimental import pallas as pl
from jax.experimental.pallas import tpu as pltpu


def _critic_kernel(x_ref, a_ref, w1x_ref, w1a_ref, b1_ref, w2_ref, b2_ref,
                   w3_ref, b3_ref, o_ref):
    # fc1 with the concat fused as two MXU dots: h1 = relu(x@w1x + a@w1a + b1)
    h1 = jnp.dot(x_ref[...], w1x_ref[...], preferred_element_type=jnp.float32)
    h1 = h1 + jnp.dot(a_ref[...], w1a_ref[...], preferred_element_type=jnp.float32)
    h1 = jnp.maximum(h1 + b1_ref[...], 0.0)
    # fc2 + ReLU
    h2 = jnp.dot(h1, w2_ref[...], preferred_element_type=jnp.float32)
    h2 = jnp.maximum(h2 + b2_ref[...], 0.0)
    # fc3: N=1 -> VPU multiply + lane reduce instead of a 1-column MXU matmul.
    out = jnp.sum(h2 * w3_ref[...], axis=-1, keepdims=True) + b3_ref[...]
    o_ref[...] = out.astype(o_ref.dtype)


def critic_forward(x, a, params):
    """x: [B, obs], a: [B, act] -> [B, 1].  Concat/fc1/fc2/fc3 all in one kernel."""
    w1x, w1a, b1, w2, b2, w3, b3 = params
    x = x.astype(jnp.float32)
    a = a.astype(jnp.float32)
    B, obs = x.shape
    act = a.shape[1]
    hidden = w2.shape[0]

    # Batch tiling: one full-size tile for small B, 128-row tiles otherwise.
    if B <= 128:
        tile_b, b_pad = B, B
    else:
        tile_b = 128
        b_pad = pl.cdiv(B, tile_b) * tile_b
        if b_pad != B:
            x = jnp.pad(x, ((0, b_pad - B), (0, 0)))
            a = jnp.pad(a, ((0, b_pad - B), (0, 0)))
    grid = (b_pad // tile_b,)

    # Weights/biases: same block for every grid step -> stay resident in VMEM.
    resident = lambda arr: pl.BlockSpec(arr.shape, lambda i: (0,) * arr.ndim)

    flops = 2 * b_pad * ((obs + act) * hidden + hidden * hidden + hidden)
    weight_bytes = 4 * ((obs + act) * hidden + hidden
                        + hidden * hidden + hidden + hidden + 1)
    bytes_accessed = 4 * b_pad * (obs + act + 1) + weight_bytes

    out = pl.pallas_call(
        _critic_kernel,
        out_shape=jax.ShapeDtypeStruct((b_pad, 1), jnp.float32),
        grid=grid,
        in_specs=[
            pl.BlockSpec((tile_b, obs), lambda i: (i, 0)),
            pl.BlockSpec((tile_b, act), lambda i: (i, 0)),
            resident(w1x), resident(w1a), resident(b1),
            resident(w2), resident(b2), resident(w3), resident(b3),
        ],
        out_specs=pl.BlockSpec((tile_b, 1), lambda i: (i, 0)),
        compiler_params=pltpu.CompilerParams(dimension_semantics=("parallel",)),
        cost_estimate=pl.CostEstimate(flops=flops, transcendentals=0,
                                      bytes_accessed=bytes_accessed),
    )(x, a, w1x, w1a, b1, w2, b2, w3, b3)
    return out[:B]


def init_critic_params(key, observation_size, action_size, hidden=256):
    """Deterministic init mimicking PyTorch nn.Linear default (uniform +/- 1/sqrt(fan_in))."""
    in_dim = observation_size + action_size

    def linear(key, fan_in, fan_out):
        kw, kb = jax.random.split(key)
        bound = 1.0 / math.sqrt(fan_in)
        w = jax.random.uniform(kw, (fan_in, fan_out), jnp.float32, -bound, bound)
        b = jax.random.uniform(kb, (1, fan_out), jnp.float32, -bound, bound)
        return w, b

    k1, k2, k3 = jax.random.split(key, 3)
    w1, b1 = linear(k1, in_dim, hidden)
    w2, b2 = linear(k2, hidden, hidden)
    w3, b3 = linear(k3, hidden, 1)
    # Split W1 so the kernel can fuse the concat; keep w3 as a [1, hidden] row.
    w1x, w1a = w1[:observation_size], w1[observation_size:]
    return (w1x, w1a, b1, w2, b2, w3.T, b3)


def critic_reference(x, a, params):
    """Pure-JAX reference of the PyTorch forward."""
    w1x, w1a, b1, w2, b2, w3, b3 = params
    h = jnp.concatenate([x, a], axis=1)
    w1 = jnp.concatenate([w1x, w1a], axis=0)
    h = jnp.maximum(h @ w1 + b1, 0.0)
    h = jnp.maximum(h @ w2 + b2, 0.0)
    return h @ w3.T + b3


if __name__ == "__main__":
    key = jax.random.PRNGKey(0)
    k_params, k_x, k_a = jax.random.split(key, 3)

    batch = 8
    observation_size = 24
    action_size = 2

    params = init_critic_params(k_params, observation_size, action_size)
    x = jax.random.normal(k_x, (batch, observation_size), jnp.float32)
    a = jax.random.normal(k_a, (batch, action_size), jnp.float32)

    out = critic_forward(x, a, params)
    out = jax.block_until_ready(out)

    ref = critic_reference(x, a, params)
    assert out.shape == (batch, 1), out.shape
    assert jnp.allclose(out, ref, atol=1e-4, rtol=1e-4), "mismatch vs reference"

    print("KERNEL_OK")
</pallas_src>

<mosaic_0001>
module attributes {stable_mosaic.version = 11 : i64} {
  func.func @_critic_kernel(%arg0: i32, %arg1: memref<8x24xf32, #tpu.memory_space<vmem>>, %arg2: memref<8x2xf32, #tpu.memory_space<vmem>>, %arg3: memref<24x256xf32, #tpu.memory_space<vmem>>, %arg4: memref<2x256xf32, #tpu.memory_space<vmem>>, %arg5: memref<1x256xf32, #tpu.memory_space<vmem>>, %arg6: memref<256x256xf32, #tpu.memory_space<vmem>>, %arg7: memref<1x256xf32, #tpu.memory_space<vmem>>, %arg8: memref<1x256xf32, #tpu.memory_space<vmem>>, %arg9: memref<1x1xf32, #tpu.memory_space<vmem>>, %arg10: memref<8x1xf32, #tpu.memory_space<vmem>>) attributes {dimension_semantics = [#tpu.dimension_semantics<parallel>], iteration_bounds = array<i64: 1>, scalar_prefetch = 0 : i64, scratch_operands = 0 : i64, tpu.core_type = #tpu.core_type<tc>, window_params = [{transform_indices = @transform_0, window_bounds = array<i64: 8, 24>}, {transform_indices = @transform_1, window_bounds = array<i64: 8, 2>}, {pipeline_mode = #tpu.pipeline_mode<synchronous>, transform_indices = @transform_2, window_bounds = array<i64: 24, 256>}, {pipeline_mode = #tpu.pipeline_mode<synchronous>, transform_indices = @transform_3, window_bounds = array<i64: 2, 256>}, {pipeline_mode = #tpu.pipeline_mode<synchronous>, transform_indices = @transform_4, window_bounds = array<i64: 1, 256>}, {pipeline_mode = #tpu.pipeline_mode<synchronous>, transform_indices = @transform_5, window_bounds = array<i64: 256, 256>}, {pipeline_mode = #tpu.pipeline_mode<synchronous>, transform_indices = @transform_6, window_bounds = array<i64: 1, 256>}, {pipeline_mode = #tpu.pipeline_mode<synchronous>, transform_indices = @transform_7, window_bounds = array<i64: 1, 256>}, {pipeline_mode = #tpu.pipeline_mode<synchronous>, transform_indices = @transform_8, window_bounds = array<i64: 1, 1>}, {transform_indices = @transform_9, window_bounds = array<i64: 8, 1>}]} {
    %c0 = arith.constant 0 : index
    %c0_0 = arith.constant 0 : index
    %0 = vector.load %arg1[%c0, %c0_0] : memref<8x24xf32, #tpu.memory_space<vmem>>, vector<8x24xf32>
    %c0_1 = arith.constant 0 : index
    %c0_2 = arith.constant 0 : index
    %1 = vector.load %arg3[%c0_1, %c0_2] : memref<24x256xf32, #tpu.memory_space<vmem>>, vector<24x256xf32>
    %cst = arith.constant dense<0.000000e+00> : vector<8x256xf32>
    %2 = tpu.matmul %0, %1, %cst {dimension_numbers = #tpu.dot_dimension_numbers<[1], [0], [0], [1], [0, 0, 1, 1], [], []>} : vector<8x24xf32>, vector<24x256xf32>, vector<8x256xf32> -> vector<8x256xf32>
    %c0_3 = arith.constant 0 : index
    %c0_4 = arith.constant 0 : index
    %3 = vector.load %arg2[%c0_3, %c0_4] : memref<8x2xf32, #tpu.memory_space<vmem>>, vector<8x2xf32>
    %c0_5 = arith.constant 0 : index
    %c0_6 = arith.constant 0 : index
    %4 = vector.load %arg4[%c0_5, %c0_6] : memref<2x256xf32, #tpu.memory_space<vmem>>, vector<2x256xf32>
    %cst_7 = arith.constant dense<0.000000e+00> : vector<8x256xf32>
    %5 = tpu.matmul %3, %4, %cst_7 {dimension_numbers = #tpu.dot_dimension_numbers<[1], [0], [0], [1], [0, 0, 1, 1], [], []>} : vector<8x2xf32>, vector<2x256xf32>, vector<8x256xf32> -> vector<8x256xf32>
    %6 = arith.addf %2, %5 : vector<8x256xf32>
    %c0_8 = arith.constant 0 : index
    %c0_9 = arith.constant 0 : index
    %7 = vector.load %arg5[%c0_8, %c0_9] : memref<1x256xf32, #tpu.memory_space<vmem>>, vector<1x256xf32>
    %8 = vector.broadcast %7 : vector<1x256xf32> to vector<8x256xf32>
    %9 = arith.addf %6, %8 : vector<8x256xf32>
    %cst_10 = arith.constant 0.000000e+00 : f32
    %10 = vector.broadcast %cst_10 : f32 to vector<8x256xf32>
    %11 = arith.maximumf %9, %10 : vector<8x256xf32>
    %c0_11 = arith.constant 0 : index
    %c0_12 = arith.constant 0 : index
    %12 = vector.load %arg6[%c0_11, %c0_12] : memref<256x256xf32, #tpu.memory_space<vmem>>, vector<256x256xf32>
    %cst_13 = arith.constant dense<0.000000e+00> : vector<8x256xf32>
    %13 = tpu.matmul %11, %12, %cst_13 {dimension_numbers = #tpu.dot_dimension_numbers<[1], [0], [0], [1], [0, 0, 1, 1], [], []>} : vector<8x256xf32>, vector<256x256xf32>, vector<8x256xf32> -> vector<8x256xf32>
    %c0_14 = arith.constant 0 : index
    %c0_15 = arith.constant 0 : index
    %14 = vector.load %arg7[%c0_14, %c0_15] : memref<1x256xf32, #tpu.memory_space<vmem>>, vector<1x256xf32>
    %15 = vector.broadcast %14 : vector<1x256xf32> to vector<8x256xf32>
    %16 = arith.addf %13, %15 : vector<8x256xf32>
    %cst_16 = arith.constant 0.000000e+00 : f32
    %17 = vector.broadcast %cst_16 : f32 to vector<8x256xf32>
    %18 = arith.maximumf %16, %17 : vector<8x256xf32>
    %c0_17 = arith.constant 0 : index
    %c0_18 = arith.constant 0 : index
    %19 = vector.load %arg8[%c0_17, %c0_18] : memref<1x256xf32, #tpu.memory_space<vmem>>, vector<1x256xf32>
    %20 = vector.broadcast %19 : vector<1x256xf32> to vector<8x256xf32>
    %21 = arith.mulf %18, %20 : vector<8x256xf32>
    %cst_19 = arith.constant dense<0.000000e+00> : vector<8xf32>
    %22 = vector.multi_reduction <add>, %21, %cst_19 [1] : vector<8x256xf32> to vector<8xf32>
    %23 = vector.shape_cast %22 : vector<8xf32> to vector<8x1xf32>
    %c0_20 = arith.constant 0 : index
    %c0_21 = arith.constant 0 : index
    %24 = vector.load %arg9[%c0_20, %c0_21] : memref<1x1xf32, #tpu.memory_space<vmem>>, vector<1x1xf32>
    %25 = vector.broadcast %24 : vector<1x1xf32> to vector<8x1xf32>
    %26 = arith.addf %23, %25 : vector<8x1xf32>
    %c0_22 = arith.constant 0 : index
    %c0_23 = arith.constant 0 : index
    %27 = vector.load %arg10[%c0_22, %c0_23] : memref<8x1xf32, #tpu.memory_space<vmem>>, vector<8x1xf32>
    tpu.vector_store %arg10[%c0_22, %c0_23], %26 {strides = array<i32>} : memref<8x1xf32, #tpu.memory_space<vmem>>, vector<8x1xf32>,
    return
  }
  func.func @transform_0(%arg0: i32) -> (i32, i32) {
    %c0_i32 = arith.constant 0 : i32
    %c0_i32_0 = arith.constant 0 : i32
    return %arg0, %c0_i32 : i32, i32
  }
  func.func @transform_1(%arg0: i32) -> (i32, i32) {
    %c0_i32 = arith.constant 0 : i32
    %c0_i32_0 = arith.constant 0 : i32
    return %arg0, %c0_i32 : i32, i32
  }
  func.func @transform_2(%arg0: i32) -> (i32, i32) {
    %c0_i32 = arith.constant 0 : i32
    %c0_i32_0 = arith.constant 0 : i32
    %c0_i32_1 = arith.constant 0 : i32
    return %c0_i32, %c0_i32_0 : i32, i32
  }
  func.func @transform_3(%arg0: i32) -> (i32, i32) {
    %c0_i32 = arith.constant 0 : i32
    %c0_i32_0 = arith.constant 0 : i32
    %c0_i32_1 = arith.constant 0 : i32
    return %c0_i32, %c0_i32_0 : i32, i32
  }
  func.func @transform_4(%arg0: i32) -> (i32, i32) {
    %c0_i32 = arith.constant 0 : i32
    %c0_i32_0 = arith.constant 0 : i32
    %c0_i32_1 = arith.constant 0 : i32
    return %c0_i32, %c0_i32_0 : i32, i32
  }
  func.func @transform_5(%arg0: i32) -> (i32, i32) {
    %c0_i32 = arith.constant 0 : i32
    %c0_i32_0 = arith.constant 0 : i32
    %c0_i32_1 = arith.constant 0 : i32
    return %c0_i32, %c0_i32_0 : i32, i32
  }
  func.func @transform_6(%arg0: i32) -> (i32, i32) {
    %c0_i32 = arith.constant 0 : i32
    %c0_i32_0 = arith.constant 0 : i32
    %c0_i32_1 = arith.constant 0 : i32
    return %c0_i32, %c0_i32_0 : i32, i32
  }
  func.func @transform_7(%arg0: i32) -> (i32, i32) {
    %c0_i32 = arith.constant 0 : i32
    %c0_i32_0 = arith.constant 0 : i32
    %c0_i32_1 = arith.constant 0 : i32
    return %c0_i32, %c0_i32_0 : i32, i32
  }
  func.func @transform_8(%arg0: i32) -> (i32, i32) {
    %c0_i32 = arith.constant 0 : i32
    %c0_i32_0 = arith.constant 0 : i32
    %c0_i32_1 = arith.constant 0 : i32
    return %c0_i32, %c0_i32_0 : i32, i32
  }
  func.func @transform_9(%arg0: i32) -> (i32, i32) {
    %c0_i32 = arith.constant 0 : i32
    %c0_i32_0 = arith.constant 0 : i32
    return %arg0, %c0_i32 : i32, i32
  }
}

</mosaic_0001>

<llo_original>
// kernel: tpu_custom_call.1
$region0: #{tpu_custom_call.1}
  #allocation0 [shape = 'u32[]', space=smem, size = 0x4, offset = 0x4, fixed_abs, tag = 'smem constant byte address 0x4 - core index']
  #allocation1 [shape = 'u32[144,128]{1,0:T(1,128)}', space=vmem, size = 0x12000, scoped, tag = 'internal scratch']
  #allocation2 [shape = 'f32[1,1]{1,0:T(1,128)S(1)}', space=vmem, size = 0x200, scoped, tag = 'scoped memory for tpu_custom_call.1']
  %s0 = inlined_call_operand.vmem [shape: f32[8,24], index: 0, kind: input, shape index: {}]
  %s1 = inlined_call_operand.vmem [shape: f32[8,2], index: 1, kind: input, shape index: {}]
  %s2 = inlined_call_operand.hbm [shape: f32[24,256], index: 2, kind: input, shape index: {}]
  %s3 = inlined_call_operand.vmem [shape: f32[2,256], index: 3, kind: input, shape index: {}]
  %s4 = inlined_call_operand.vmem [shape: f32[1,256], index: 4, kind: input, shape index: {}]
  %s5 = inlined_call_operand.hbm [shape: f32[256,256], index: 5, kind: input, shape index: {}]
  %s6 = inlined_call_operand.vmem [shape: f32[1,256], index: 6, kind: input, shape index: {}]
  %s7 = inlined_call_operand.vmem [shape: f32[1,256], index: 7, kind: input, shape index: {}]
  %s8 = inlined_call_operand.<no memory space> [shape: f32[1,1], index: 8, kind: input, shape index: {}]
  %s9 = inlined_call_operand.vmem [shape: f32[8,1], index: 9, kind: output, shape index: {}]
  %s10 = sld [smem:[#allocation0]]
  $region54: #{tpu_custom_call.1} parent=0
    _
  %s12 = ssub.s32 1, %s10
  %s13 = scalar_select 0, %s12, %s10
  %v14 = vstv %s8
  %15 = vst [vmem:[#allocation2] sm:$0x1] %v14
  $region1: #{tpu_custom_call.1} parent=0
    #allocation3 [shape = 'u8[24576]{0}', space=vmem, size = 0x6000, scoped, tag = 'input window, operand 2, single buffered']
    #allocation4 [shape = 's32[1]{0}', space=sflag, size = 0x4, scoped, tag = 'scoped memory for tpu_custom_call.1']
    #allocation5 [shape = 'u8[262144]{0}', space=vmem, size = 0x40000, scoped, tag = 'input window, operand 5, single buffered']
    #allocation6 [shape = 's32[1]{0}', space=sflag, size = 0x4, scoped, tag = 'scoped memory for tpu_custom_call.1']
    %16 = vsyncpa [#allocation4], 0
    %17 = vsyncpa [#allocation6], 0
    // Predicated region
    $region2: #{tpu_custom_call.1} parent=1 // pred_check
      _
    $region3: #{tpu_custom_call.1} parent=1 // pred_check_branch
      %19 = sbr.rel (0) target = $region5
    $region4: #{tpu_custom_call.1} parent=1 // pred_region
      _
    $region5: #{tpu_custom_call.1} parent=1 // pred_fallthru
      _
    // Predicated region
    $region6: #{tpu_custom_call.1} parent=1 // pred_check
      _
    $region7: #{tpu_custom_call.1} parent=1 // pred_check_branch
      %21 = sbr.rel (0) target = $region9
    $region8: #{tpu_custom_call.1} parent=1 // pred_region
      _
    $region9: #{tpu_custom_call.1} parent=1 // pred_fallthru
      _
    // Predicated region
    $region10: #{tpu_custom_call.1} parent=1 // pred_check
      _
    $region11: #{tpu_custom_call.1} parent=1 // pred_check_branch
      %23 = sbr.rel (0) target = $region13
    $region12: #{tpu_custom_call.1} parent=1 // pred_region
      %s25 = ssub.s32 768, 768
      %26 = vsyncadd [#allocation4], %s25
      %s27 = sshll.u32 [#allocation3], 4
      %s28 = int_to_ptr.vmem [resolvable:$true] %s27
      %33 = dma.hbm_to_vmem [thread:$0]  %s2, 768, %s28, [#allocation4], 256, 256, 16
    $region13: #{tpu_custom_call.1} parent=1 // pred_fallthru
      _
    // Predicated region
    $region14: #{tpu_custom_call.1} parent=1 // pred_check
      _
    $region15: #{tpu_custom_call.1} parent=1 // pred_check_branch
      %35 = sbr.rel (0) target = $region17
    $region16: #{tpu_custom_call.1} parent=1 // pred_region
      _
    $region17: #{tpu_custom_call.1} parent=1 // pred_fallthru
      _
    // Predicated region
    $region18: #{tpu_custom_call.1} parent=1 // pred_check
      _
    $region19: #{tpu_custom_call.1} parent=1 // pred_check_branch
      %37 = sbr.rel (0) target = $region21
    $region20: #{tpu_custom_call.1} parent=1 // pred_region
      _
    $region21: #{tpu_custom_call.1} parent=1 // pred_fallthru
      _
    // Predicated region
    $region22: #{tpu_custom_call.1} parent=1 // pred_check
      _
    $region23: #{tpu_custom_call.1} parent=1 // pred_check_branch
      %39 = sbr.rel (0) target = $region25
    $region24: #{tpu_custom_call.1} parent=1 // pred_region
      %s41 = ssub.s32 8192, 8192
      %42 = vsyncadd [#allocation6], %s41
      %s43 = sshll.u32 [#allocation5], 4
      %s44 = int_to_ptr.vmem [resolvable:$true] %s43
      %49 = dma.hbm_to_vmem [thread:$0]  %s5, 8192, %s44, [#allocation6], 256, 256, 16
    $region25: #{tpu_custom_call.1} parent=1 // pred_fallthru
      _
    // Predicated region
    $region26: #{tpu_custom_call.1} parent=1 // pred_check
      _
    $region27: #{tpu_custom_call.1} parent=1 // pred_check_branch
      %51 = sbr.rel (0) target = $region29
    $region28: #{tpu_custom_call.1} parent=1 // pred_region
      _
    $region29: #{tpu_custom_call.1} parent=1 // pred_fallthru
      _
    // Predicated region
    $region30: #{tpu_custom_call.1} parent=1 // pred_check
      _
    $region31: #{tpu_custom_call.1} parent=1 // pred_check_branch
      %53 = sbr.rel (0) target = $region33
    $region32: #{tpu_custom_call.1} parent=1 // pred_region
      _
    $region33: #{tpu_custom_call.1} parent=1 // pred_fallthru
      _
    // Predicated region
    $region34: #{tpu_custom_call.1} parent=1 // pred_check
      _
    $region35: #{tpu_custom_call.1} parent=1 // pred_check_branch
      %55 = sbr.rel (0) target = $region37
    $region36: #{tpu_custom_call.1} parent=1 // pred_region
      _
    $region37: #{tpu_custom_call.1} parent=1 // pred_fallthru
      _
    // Predicated region
    $region38: #{tpu_custom_call.1} parent=1 // pred_check
      _
    $region39: #{tpu_custom_call.1} parent=1 // pred_check_branch
      %57 = sbr.rel (0) target = $region41
    $region40: #{tpu_custom_call.1} parent=1 // pred_region
      %58 = dma.done [#allocation4], 768
    $region41: #{tpu_custom_call.1} parent=1 // pred_fallthru
      _
    // Predicated region
    $region42: #{tpu_custom_call.1} parent=1 // pred_check
      _
    $region43: #{tpu_custom_call.1} parent=1 // pred_check_branch
      %60 = sbr.rel (0) target = $region45
    $region44: #{tpu_custom_call.1} parent=1 // pred_region
      %61 = dma.done [#allocation6], 8192
    $region45: #{tpu_custom_call.1} parent=1 // pred_fallthru
      _
    %v62 = vld [vmem:[%s0] sm:$0xff]
    %v63 = vld [vmem:[#allocation3] sm:$0xff]
    %v64 = vld [vmem:[#allocation3 + $0x8] sm:$0xff]
    %v65 = vld [vmem:[#allocation3 + $0x10] sm:$0xff]
    %v66 = vld [vmem:[#allocation3 + $0x18] sm:$0xff]
    %v67 = vld [vmem:[#allocation3 + $0x20] sm:$0xff]
    %v68 = vld [vmem:[#allocation3 + $0x28] sm:$0xff]
    %v69 = vld [vmem:[%s1] sm:$0xff]
    %v70 = vld [vmem:[%s3] sm:$0xf]
    %v73 = vunpack.c.l.s4 1983009808
    %v74 = vunpack.c.0.s8 %v73
    %v75 = vlaneseq
    %v76 = vshrl.u32 %v75, 7
    %v77 = vsub.s32 %v74, %v76
    %v78 = vrot.slane %v70, %v77
    %v79 = vcombine.high %v78, %v78
    %vm80 = vcmask 15360
    %v82 = vsel %vm80, %v69, 0
    %vm84 = vcmask 1041408
    %v85 = vsel %vm84, %v78, 0
    %v87 = vsel %vm84, %v79, 0
    %89 = vmatprep.subr.mxu0 %v87
    %90 = vmatpush1.msra.mxu0 %v85
    %91 = vmatprep.subr.mxu0 0.0
    %92 = vmatpush1.msra.mxu0 0.0
    %93 = vmatprep.subr.mxu0 0.0
    %94 = vmatpush1.msra.mxu0 0.0
    %95 = vmatprep.subr.mxu0 0.0
    %96 = vmatpush1.msra.mxu0 0.0
    %97 = vmatprep.subr.mxu0 0.0
    %98 = vmatpush1.msra.mxu0 0.0
    %99 = vmatprep.subr.mxu0 0.0
    %100 = vmatpush1.msra.mxu0 0.0
    %101 = vmatprep.subr.mxu0 0.0
    %102 = vmatpush1.msra.mxu0 0.0
    %103 = vmatprep.subr.mxu0 0.0
    %104 = vmatpush1.msra.mxu0 0.0
    %105 = vmatprep.subr.mxu0 0.0
    %106 = vmatpush1.msra.mxu0 0.0
    %107 = vmatprep.subr.mxu0 0.0
    %108 = vmatpush1.msra.mxu0 0.0
    %109 = vmatprep.subr.mxu0 0.0
    %110 = vmatpush1.msra.mxu0 0.0
    %111 = vmatprep.subr.mxu0 0.0
    %112 = vmatpush1.msra.mxu0 0.0
    %113 = vmatprep.subr.mxu0 0.0
    %114 = vmatpush1.msra.mxu0 0.0
    %115 = vmatprep.subr.mxu0 0.0
    %116 = vmatpush1.msra.mxu0 0.0
    %117 = vmatprep.subr.mxu0 0.0
    %118 = vmatpush1.msra.mxu0 0.0
    %119 = vmatprep.subr.mxu0 0.0
    %120 = vmatpush1.msra.mxu0 0.0
    %121 = vmatprep.subr.mxu0 0.0
    %122 = vmatpush1.msra.mxu0 0.0
    %123 = vmatprep.subr.mxu0 0.0
    %124 = vmatpush1.msra.mxu0 0.0
    %125 = vmatprep.subr.mxu0 0.0
    %126 = vmatpush1.msra.mxu0 0.0
    %127 = vmatprep.subr.mxu0 0.0
    %128 = vmatpush1.msra.mxu0 0.0
    %129 = vmatprep.subr.mxu0 0.0
    %130 = vmatpush1.msra.mxu0 0.0
    %131 = vmatprep.subr.mxu0 0.0
    %132 = vmatpush1.msra.mxu0 0.0
    %133 = vmatprep.subr.mxu0 0.0
    %134 = vmatpush1.msra.mxu0 0.0
    %135 = vmatprep.subr.mxu0 0.0
    %136 = vmatpush1.msra.mxu0 0.0
    %137 = vmatprep.subr.mxu0 0.0
    %138 = vmatpush1.msra.mxu0 0.0
    %139 = vmatprep.subr.mxu0 0.0
    %140 = vmatpush1.msra.mxu0 0.0
    %141 = vmatprep.subr.mxu0 0.0
    %142 = vmatpush1.msra.mxu0 0.0
    %143 = vmatprep.subr.mxu0 0.0
    %144 = vmatpush1.msra.mxu0 0.0
    %145 = vmatprep.subr.mxu0 0.0
    %146 = vmatpush1.msra.mxu0 0.0
    %147 = vmatprep.subr.mxu0 0.0
    %148 = vmatpush1.msra.mxu0 0.0
    %149 = vmatprep.subr.mxu0 0.0
    %150 = vmatpush1.msra.mxu0 0.0
    %151 = vmatprep.subr.mxu0 0.0
    %152 = vmatpush1.msra.mxu0 0.0
    %153 = vmatprep.mubr.f32.mxu0 0.0
    %154 = vmatmul.mubr.f32.gmra.mrb[0].mxu0 %v82
    %v155 = vpop.f32.mrb[0].mxu0
    %v156 = vadd.f32 0.0, %v155
    %v157 = vpop.f32.mrb[0].mxu0
    %v158 = vadd.f32 0.0, %v157
    %159 = vdwg.mxu0
    %vm160 = vcmask 195584
    %v162 = vsel %vm160, %v62, 0
    %164 = vmatprep.subr.mxu0 %v64
    %165 = vmatpush1.msra.mxu0 %v63
    %166 = vmatprep.subr.mxu0 %v66
    %167 = vmatpush1.msra.mxu0 %v65
    %168 = vmatprep.subr.mxu0 %v68
    %169 = vmatpush1.msra.mxu0 %v67
    %170 = vmatprep.subr.mxu0 0.0
    %171 = vmatpush1.msra.mxu0 0.0
    %172 = vmatprep.subr.mxu0 0.0
    %173 = vmatpush1.msra.mxu0 0.0
    %174 = vmatprep.subr.mxu0 0.0
    %175 = vmatpush1.msra.mxu0 0.0
    %176 = vmatprep.subr.mxu0 0.0
    %177 = vmatpush1.msra.mxu0 0.0
    %178 = vmatprep.subr.mxu0 0.0
    %179 = vmatpush1.msra.mxu0 0.0
    %180 = vmatprep.subr.mxu0 0.0
    %181 = vmatpush1.msra.mxu0 0.0
    %182 = vmatprep.subr.mxu0 0.0
    %183 = vmatpush1.msra.mxu0 0.0
    %184 = vmatprep.subr.mxu0 0.0
    %185 = vmatpush1.msra.mxu0 0.0
    %186 = vmatprep.subr.mxu0 0.0
    %187 = vmatpush1.msra.mxu0 0.0
    %188 = vmatprep.subr.mxu0 0.0
    %189 = vmatpush1.msra.mxu0 0.0
    %190 = vmatprep.subr.mxu0 0.0
    %191 = vmatpush1.msra.mxu0 0.0
    %192 = vmatprep.subr.mxu0 0.0
    %193 = vmatpush1.msra.mxu0 0.0
    %194 = vmatprep.subr.mxu0 0.0
    %195 = vmatpush1.msra.mxu0 0.0
    %196 = vmatprep.subr.mxu0 0.0
    %197 = vmatpush1.msra.mxu0 0.0
    %198 = vmatprep.subr.mxu0 0.0
    %199 = vmatpush1.msra.mxu0 0.0
    %200 = vmatprep.subr.mxu0 0.0
    %201 = vmatpush1.msra.mxu0 0.0
    %202 = vmatprep.subr.mxu0 0.0
    %203 = vmatpush1.msra.mxu0 0.0
    %204 = vmatprep.subr.mxu0 0.0
    %205 = vmatpush1.msra.mxu0 0.0
    %206 = vmatprep.subr.mxu0 0.0
    %207 = vmatpush1.msra.mxu0 0.0
    %208 = vmatprep.subr.mxu0 0.0
    %209 = vmatpush1.msra.mxu0 0.0
    %210 = vmatprep.subr.mxu0 0.0
    %211 = vmatpush1.msra.mxu0 0.0
    %212 = vmatprep.subr.mxu0 0.0
    %213 = vmatpush1.msra.mxu0 0.0
    %214 = vmatprep.subr.mxu0 0.0
    %215 = vmatpush1.msra.mxu0 0.0
    %216 = vmatprep.subr.mxu0 0.0
    %217 = vmatpush1.msra.mxu0 0.0
    %218 = vmatprep.subr.mxu0 0.0
    %219 = vmatpush1.msra.mxu0 0.0
    %220 = vmatprep.subr.mxu0 0.0
    %221 = vmatpush1.msra.mxu0 0.0
    %222 = vmatprep.subr.mxu0 0.0
    %223 = vmatpush1.msra.mxu0 0.0
    %224 = vmatprep.subr.mxu0 0.0
    %225 = vmatpush1.msra.mxu0 0.0
    %226 = vmatprep.subr.mxu0 0.0
    %227 = vmatpush1.msra.mxu0 0.0
    %228 = vmatprep.mubr.f32.mxu0 0.0
    %229 = vmatmul.mubr.f32.gmra.mrb[0].mxu0 %v162
    %v230 = vpop.f32.mrb[0].mxu0
    %v231 = vadd.f32 %v156, %v230
    %v232 = vpop.f32.mrb[0].mxu0
    %v233 = vadd.f32 %v158, %v232
    %234 = vdwg.mxu0
    %v235 = vld [vmem:[%s4] sm:$0x3]
    %v237 = vlaneseq
    %v238 = vshrl.u32 %v237, 7
    %v239 = vsub.s32 0, %v238
    %v240 = vrot.slane %v235, %v239
    %v241 = vlaneseq
    %v242 = vshrl.u32 %v241, 7
    %v243 = vsub.s32 1, %v242
    %v244 = vrot.slane %v235, %v243
    %v247 = vadd.f32 %v231, %v240
    %v248 = vadd.f32 %v233, %v244
    %v249 = vmax.f32 %v247, 0.0
    %v250 = vmax.f32 %v248, 0.0
    %v251 = vld [vmem:[#allocation5] sm:$0xff]
    %v252 = vld [vmem:[#allocation5 + $0x8] sm:$0xff]
    %v253 = vld [vmem:[#allocation5 + $0x10] sm:$0xff]
    %v254 = vld [vmem:[#allocation5 + $0x18] sm:$0xff]
    %v255 = vld [vmem:[#allocation5 + $0x20] sm:$0xff]
    %v256 = vld [vmem:[#allocation5 + $0x28] sm:$0xff]
    %v257 = vld [vmem:[#allocation5 + $0x30] sm:$0xff]
    %v258 = vld [vmem:[#allocation5 + $0x38] sm:$0xff]
    %v259 = vld [vmem:[#allocation5 + $0x40] sm:$0xff]
    %v260 = vld [vmem:[#allocation5 + $0x48] sm:$0xff]
    %v261 = vld [vmem:[#allocation5 + $0x50] sm:$0xff]
    %v262 = vld [vmem:[#allocation5 + $0x58] sm:$0xff]
    %v263 = vld [vmem:[#allocation5 + $0x60] sm:$0xff]
    %v264 = vld [vmem:[#allocation5 + $0x68] sm:$0xff]
    %v265 = vld [vmem:[#allocation5 + $0x70] sm:$0xff]
    %v266 = vld [vmem:[#allocation5 + $0x78] sm:$0xff]
    %v267 = vld [vmem:[#allocation5 + $0x80] sm:$0xff]
    %v268 = vld [vmem:[#allocation5 + $0x88] sm:$0xff]
    %v269 = vld [vmem:[#allocation5 + $0x90] sm:$0xff]
    %v270 = vld [vmem:[#allocation5 + $0x98] sm:$0xff]
    %v271 = vld [vmem:[#allocation5 + $0xa0] sm:$0xff]
    %v272 = vld [vmem:[#allocation5 + $0xa8] sm:$0xff]
    %v273 = vld [vmem:[#allocation5 + $0xb0] sm:$0xff]
    %v274 = vld [vmem:[#allocation5 + $0xb8] sm:$0xff]
    %v275 = vld [vmem:[#allocation5 + $0xc0] sm:$0xff]
    %v276 = vld [vmem:[#allocation5 + $0xc8] sm:$0xff]
    %v277 = vld [vmem:[#allocation5 + $0xd0] sm:$0xff]
    %v278 = vld [vmem:[#allocation5 + $0xd8] sm:$0xff]
    %v279 = vld [vmem:[#allocation5 + $0xe0] sm:$0xff]
    %v280 = vld [vmem:[#allocation5 + $0xe8] sm:$0xff]
    %v281 = vld [vmem:[#allocation5 + $0xf0] sm:$0xff]
    %v282 = vld [vmem:[#allocation5 + $0xf8] sm:$0xff]
    %v283 = vld [vmem:[#allocation5 + $0x100] sm:$0xff]
    %v284 = vld [vmem:[#allocation5 + $0x108] sm:$0xff]
    %v285 = vld [vmem:[#allocation5 + $0x110] sm:$0xff]
    %v286 = vld [vmem:[#allocation5 + $0x118] sm:$0xff]
    %v287 = vld [vmem:[#allocation5 + $0x120] sm:$0xff]
    %v288 = vld [vmem:[#allocation5 + $0x128] sm:$0xff]
    %v289 = vld [vmem:[#allocation5 + $0x130] sm:$0xff]
    %v290 = vld [vmem:[#allocation5 + $0x138] sm:$0xff]
    %v291 = vld [vmem:[#allocation5 + $0x140] sm:$0xff]
    %v292 = vld [vmem:[#allocation5 + $0x148] sm:$0xff]
    %v293 = vld [vmem:[#allocation5 + $0x150] sm:$0xff]
    %v294 = vld [vmem:[#allocation5 + $0x158] sm:$0xff]
    %v295 = vld [vmem:[#allocation5 + $0x160] sm:$0xff]
    %v296 = vld [vmem:[#allocation5 + $0x168] sm:$0xff]
    %v297 = vld [vmem:[#allocation5 + $0x170] sm:$0xff]
    %v298 = vld [vmem:[#allocation5 + $0x178] sm:$0xff]
    %v299 = vld [vmem:[#allocation5 + $0x180] sm:$0xff]
    %v300 = vld [vmem:[#allocation5 + $0x188] sm:$0xff]
    %v301 = vld [vmem:[#allocation5 + $0x190] sm:$0xff]
    %v302 = vld [vmem:[#allocation5 + $0x198] sm:$0xff]
    %v303 = vld [vmem:[#allocation5 + $0x1a0] sm:$0xff]
    %v304 = vld [vmem:[#allocation5 + $0x1a8] sm:$0xff]
    %v305 = vld [vmem:[#allocation5 + $0x1b0] sm:$0xff]
    %v306 = vld [vmem:[#allocation5 + $0x1b8] sm:$0xff]
    %v307 = vld [vmem:[#allocation5 + $0x1c0] sm:$0xff]
    %v308 = vld [vmem:[#allocation5 + $0x1c8] sm:$0xff]
    %v309 = vld [vmem:[#allocation5 + $0x1d0] sm:$0xff]
    %v310 = vld [vmem:[#allocation5 + $0x1d8] sm:$0xff]
    %v311 = vld [vmem:[#allocation5 + $0x1e0] sm:$0xff]
    %v312 = vld [vmem:[#allocation5 + $0x1e8] sm:$0xff]
    %v313 = vld [vmem:[#allocation5 + $0x1f0] sm:$0xff]
    %v314 = vld [vmem:[#allocation5 + $0x1f8] sm:$0xff]
    %v315 = vld [vmem:[%s6] sm:$0x3]
    %v317 = vlaneseq
    %v318 = vshrl.u32 %v317, 7
    %v319 = vsub.s32 0, %v318
    %v320 = vrot.slane %v315, %v319
    %v321 = vlaneseq
    %v322 = vshrl.u32 %v321, 7
    %v323 = vsub.s32 1, %v322
    %v324 = vrot.slane %v315, %v323
    %327 = vmatprep.subr.mxu0 %v252
    %328 = vmatpush1.msra.mxu0 %v251
    %329 = vmatprep.subr.mxu0 %v254
    %330 = vmatpush1.msra.mxu0 %v253
    %331 = vmatprep.subr.mxu0 %v256
    %332 = vmatpush1.msra.mxu0 %v255
    %333 = vmatprep.subr.mxu0 %v258
    %334 = vmatpush1.msra.mxu0 %v257
    %335 = vmatprep.subr.mxu0 %v260
    %336 = vmatpush1.msra.mxu0 %v259
    %337 = vmatprep.subr.mxu0 %v262
    %338 = vmatpush1.msra.mxu0 %v261
    %339 = vmatprep.subr.mxu0 %v264
    %340 = vmatpush1.msra.mxu0 %v263
    %341 = vmatprep.subr.mxu0 %v266
    %342 = vmatpush1.msra.mxu0 %v265
    %343 = vmatprep.subr.mxu0 %v268
    %344 = vmatpush1.msra.mxu0 %v267
    %345 = vmatprep.subr.mxu0 %v270
    %346 = vmatpush1.msra.mxu0 %v269
    %347 = vmatprep.subr.mxu0 %v272
    %348 = vmatpush1.msra.mxu0 %v271
    %349 = vmatprep.subr.mxu0 %v274
    %350 = vmatpush1.msra.mxu0 %v273
    %351 = vmatprep.subr.mxu0 %v276
    %352 = vmatpush1.msra.mxu0 %v275
    %353 = vmatprep.subr.mxu0 %v278
    %354 = vmatpush1.msra.mxu0 %v277
    %355 = vmatprep.subr.mxu0 %v280
    %356 = vmatpush1.msra.mxu0 %v279
    %357 = vmatprep.subr.mxu0 %v282
    %358 = vmatpush1.msra.mxu0 %v281
    %359 = vmatprep.subr.mxu0 %v284
    %360 = vmatpush1.msra.mxu0 %v283
    %361 = vmatprep.subr.mxu0 %v286
    %362 = vmatpush1.msra.mxu0 %v285
    %363 = vmatprep.subr.mxu0 %v288
    %364 = vmatpush1.msra.mxu0 %v287
    %365 = vmatprep.subr.mxu0 %v290
    %366 = vmatpush1.msra.mxu0 %v289
    %367 = vmatprep.subr.mxu0 %v292
    %368 = vmatpush1.msra.mxu0 %v291
    %369 = vmatprep.subr.mxu0 %v294
    %370 = vmatpush1.msra.mxu0 %v293
    %371 = vmatprep.subr.mxu0 %v296
    %372 = vmatpush1.msra.mxu0 %v295
    %373 = vmatprep.subr.mxu0 %v298
    %374 = vmatpush1.msra.mxu0 %v297
    %375 = vmatprep.subr.mxu0 %v300
    %376 = vmatpush1.msra.mxu0 %v299
    %377 = vmatprep.subr.mxu0 %v302
    %378 = vmatpush1.msra.mxu0 %v301
    %379 = vmatprep.subr.mxu0 %v304
    %380 = vmatpush1.msra.mxu0 %v303
    %381 = vmatprep.subr.mxu0 %v306
    %382 = vmatpush1.msra.mxu0 %v305
    %383 = vmatprep.subr.mxu0 %v308
    %384 = vmatpush1.msra.mxu0 %v307
    %385 = vmatprep.subr.mxu0 %v310
    %386 = vmatpush1.msra.mxu0 %v309
    %387 = vmatprep.subr.mxu0 %v312
    %388 = vmatpush1.msra.mxu0 %v311
    %389 = vmatprep.subr.mxu0 %v314
    %390 = vmatpush1.msra.mxu0 %v313
    %391 = vmatprep.mubr.f32.mxu0 %v250
    %392 = vmatmul.mubr.f32.gmra.mrb[0].mxu0 %v249
    %v393 = vpop.f32.mrb[0].mxu0
    %v394 = vadd.f32 %v320, %v393
    %v395 = vpop.f32.mrb[0].mxu0
    %v396 = vadd.f32 %v324, %v395
    %397 = vdwg.mxu0
    %v398 = vmax.f32 %v394, 0.0
    %v399 = vmax.f32 %v396, 0.0
    %v400 = vld [vmem:[%s7] sm:$0x3]
    %v402 = vlaneseq
    %v403 = vshrl.u32 %v402, 7
    %v404 = vsub.s32 0, %v403
    %v405 = vrot.slane %v400, %v404
    %v406 = vlaneseq
    %v407 = vshrl.u32 %v406, 7
    %v408 = vsub.s32 1, %v407
    %v409 = vrot.slane %v400, %v408
    %v412 = vmul.f32 %v398, %v405
    %v413 = vmul.f32 %v399, %v409
    %v414 = vadd.f32 %v412, %v413
    %415 = vadd.xlane.f32.xlu0 %v414
    %v416 = vpop.xlane.xlu0 %415
    %v417 = vld [vmem:[#allocation2] sm:$0x1]
    %v419 = vlaneseq
    %v420 = vshrl.u32 %v419, 7
    %v421 = vsub.s32 0, %v420
    %v422 = vrot.slane %v417, %v421
    %v424 = vadd.f32 %v416, %v422
    %vm425 = vcmask 7168
    %426 = vst.msk [vmem:[%s9] sm:$0xff] %vm425, %v424
    // Predicated region
    $region46: #{tpu_custom_call.1} parent=1 // pred_check
      _
    $region47: #{tpu_custom_call.1} parent=1 // pred_check_branch
      %428 = sbr.rel (0) target = $region49
    $region48: #{tpu_custom_call.1} parent=1 // pred_region
      _
    $region49: #{tpu_custom_call.1} parent=1 // pred_fallthru
      _
    // Predicated region
    $region50: #{tpu_custom_call.1} parent=1 // pred_check
      _
    $region51: #{tpu_custom_call.1} parent=1 // pred_check_branch
      %430 = sbr.rel (0) target = $region53
    $region52: #{tpu_custom_call.1} parent=1 // pred_region
      _
    $region53: #{tpu_custom_call.1} parent=1 // pred_fallthru
      _
    %431 = vsyncpa [#allocation4], 1
    %432 = vsyncpa [#allocation6], 1

</llo_original>
